<compile_context>
chip_gen: v7x
topology: tpu7x:2x2x1
jax: 0.10.0
libtpu: 0.0.40
codegen_flags: <defaults>
</compile_context>

<pallas_src>
import jax
import jax.numpy as jnp
from jax.experimental import pallas as pl
from jax.experimental.pallas import tpu as pltpu


def _round_up(x, m):
    return ((x + m - 1) // m) * m


def _tpu_caps():
    """(num_tensorcores, per-core VMEM budget in bytes) for the attached device."""
    try:
        kind = (jax.devices()[0].device_kind or "").lower()
    except Exception:
        kind = ""
    if "v7" in kind or "7x" in kind:
        return 2, 48 << 20        # v7x: 2 TCs/chip, 64 MiB VMEM/TC -> leave Mosaic headroom
    if "v5" in kind or "v6" in kind or "tpu" in kind:
        return 1, 96 << 20        # v5e/v6e: 1 TC, 128 MiB VMEM
    return 1, 32 << 20            # CPU / interpret fallback (limit is ignored there)


def _auto_tile(B, M, itemsize, vmem_budget):
    """Largest mel-time tile (multiple of 128) whose double-buffered working set
    (lane padding of M included) fits in roughly half the per-core VMEM budget."""
    lanes = _round_up(M, 128)     # e.g. M=80 occupies 128 lanes in VMEM
    b_pad = _round_up(B, 8)
    for t in (1024, 512, 256, 128):
        mel_bufs = 2 * 2 * B * t * lanes * itemsize       # mel_p + mel_t, double-buffered
        scratch = b_pad * _round_up(t, 128) * 4           # f32 accumulator
        if mel_bufs + scratch + (4 << 20) <= vmem_budget // 2:
            return t
    return 128


def _masked_l1_kernel(mel_p_ref, mel_t_ref, lens_ref, out_ref, acc_ref):
    # NOTE: all program_id / num_programs calls stay at the top level of the body.
    c = pl.program_id(0)
    i = pl.program_id(1)
    nt = pl.num_programs(1)
    B, tile, _ = mel_p_ref.shape

    @pl.when(i == 0)
    def _init():
        acc_ref[...] = jnp.zeros_like(acc_ref)

    # ---- hot path: one (B, tile, M) block of each mel tensor per grid step ----
    # TODO(synk): if a v7x trace shows the VALU slot saturating, do the abs-diff in
    # bf16 and upcast once before the masked f32 accumulate.
    diff = mel_p_ref[...].astype(jnp.float32) - mel_t_ref[...].astype(jnp.float32)
    abs_rows = jnp.sum(jnp.abs(diff), axis=-1)                    # reduce mel bins first

    # In-kernel ragged / padding mask: global row index vs per-utterance mel length.
    # jnp.where (select), not multiply — rows past the array end may hold NaN garbage.
    row = (c * nt + i) * tile + jax.lax.broadcasted_iota(jnp.int32, (B, tile), 1)
    valid = row < lens_ref[...]                                   # lens_ref: (B, 1) int32
    acc_ref[...] += jnp.where(valid, abs_rows, 0.0)

    @pl.when(i == nt - 1)
    def _finalize():
        # Lane-dense (1, 8, 128) output block; the host reads [:, 0, 0].
        out_ref[...] = jnp.zeros_like(out_ref) + jnp.sum(acc_ref[...])


def _masked_l1_sum(mel_p, mel_t, mel_lens, *, tile_lm=None):
    """sum over valid mel frames of |mel_p - mel_t| (the masked-L1 numerator)."""
    B, Lm, M = mel_p.shape
    assert mel_t.shape == (B, Lm, M)
    nc_dev, vmem_budget = _tpu_caps()
    itemsize = max(jnp.dtype(mel_p.dtype).itemsize, jnp.dtype(mel_t.dtype).itemsize)

    if tile_lm is None:
        tile = _auto_tile(B, M, itemsize, vmem_budget)
    else:
        tile = max(128, _round_up(int(tile_lm), 128))
    if tile >= Lm:
        tile = Lm                                   # single full block (always legal)
    n_tiles = pl.cdiv(Lm, tile)

    # Split tiles across TensorCores only where a second TC actually exists (v7x).
    nc = nc_dev if n_tiles >= 2 else 1
    nt = pl.cdiv(n_tiles, nc)
    last_blk = n_tiles - 1

    def mel_map(c, i):
        # Clamp the phantom block (odd tile count split across 2 cores) onto the last
        # real block; the kernel's row-index mask zeroes its contribution.
        return (0, jnp.minimum(c * nt + i, last_blk), 0)

    # VMEM budget with lane padding (M -> round_up(M, 128)).
    lanes = _round_up(M, 128)
    b_pad = _round_up(B, 8)
    tile_bytes = 2 * B * tile * lanes * itemsize          # both mel tensors, one buffer
    needed = (2 * tile_bytes                              # double-buffered
              + b_pad * _round_up(tile, 128) * 4          # acc scratch
              + 2 * b_pad * 128 * 4                       # lens block (lane padded)
              + 2 * 8 * 128 * 4                           # output block
              + (4 << 20))                                # Mosaic internal scratch
    vmem_limit = int(min(max(needed, 32 << 20), vmem_budget))

    cost = pl.CostEstimate(
        flops=int(4 * B * Lm * M),
        transcendentals=0,
        bytes_accessed=int(2 * B * Lm * M * itemsize + B * 4 + nc * 8 * 128 * 4),
    )

    # TODO(synk): if a trace shows exposed DMA at this tile size, set
    # pipeline_mode=pl.Buffered(3) on the two mel BlockSpecs.
    partial = pl.pallas_call(
        _masked_l1_kernel,
        out_shape=jax.ShapeDtypeStruct((nc, 8, 128), jnp.float32),
        grid_spec=pltpu.PrefetchScalarGridSpec(
            num_scalar_prefetch=0,
            grid=(nc, nt),
            in_specs=[pl.BlockSpec((B, tile, M), mel_map),
                      pl.BlockSpec((B, tile, M), mel_map),
                      pl.BlockSpec((B, 1), lambda c, i: (0, 0))],
            out_specs=pl.BlockSpec((1, 8, 128), lambda c, i: (c, 0, 0)),
            scratch_shapes=[pltpu.VMEM((B, tile), jnp.float32)],
        ),
        compiler_params=pltpu.CompilerParams(
            dimension_semantics=("parallel", "arbitrary"),
            vmem_limit_bytes=vmem_limit,
        ),
        cost_estimate=cost,
    )(mel_p, mel_t, mel_lens)

    return jnp.sum(partial[:, 0, 0])


class MetaStyleSpeechLossMain:
    """JAX/Pallas port of the Meta-StyleSpeech main loss (forward only)."""

    def __init__(self, preprocess_config, model_config, train_config, tile_lm=None):
        self.pitch_feature_level = preprocess_config["preprocessing"]["pitch"]["feature"]
        self.energy_feature_level = preprocess_config["preprocessing"]["energy"]["feature"]
        self.alpha = train_config["optimizer"]["alpha"]
        # tile_lm=None -> auto-pick per generation from the corrected VMEM formula.
        self.tile_lm = tile_lm

    def __call__(self, inputs, predictions):
        (mel_targets, _, _, pitch_targets, energy_targets, duration_targets,
         _, _, _, _, _) = inputs[6:]
        (D_s, D_t, mel_predictions, pitch_predictions, energy_predictions,
         log_duration_predictions, _, src_masks, mel_masks, _, _) = predictions

        f32 = jnp.float32
        Lm = mel_masks.shape[1]
        # TODO(synk): when mel_targets is longer than mel_masks this host slice makes
        # an HBM copy; bounding reads in-kernel would avoid it.
        mel_targets = mel_targets[:, :Lm, :]

        src_valid = jnp.logical_not(src_masks)
        mel_valid = jnp.logical_not(mel_masks)
        # mel_masks is a padding mask (True = pad), so per-utterance lengths fully
        # determine it; the kernel regenerates the mask from these lengths in-VMEM,
        # which also handles the ragged last tile without any host-side zero pad.
        mel_lens = jnp.sum(mel_valid, axis=-1).astype(jnp.int32)[:, None]     # (B, 1)

        # --- mel L1 term (HBM-bound): Pallas kernel computes the masked numerator ---
        mel_sum = _masked_l1_sum(mel_predictions, mel_targets, mel_lens,
                                 tile_lm=self.tile_lm)
        mel_cnt = jnp.sum(mel_valid).astype(f32) * float(mel_predictions.shape[-1])
        mel_loss = mel_sum / mel_cnt

        # --- tiny terms in plain JAX (per perf review: keep them out of the kernel) ---
        def masked_mse(pred, tgt, valid):
            v = valid.astype(f32)
            return jnp.sum(((pred.astype(f32) - tgt.astype(f32)) ** 2) * v) / jnp.sum(v)

        pit_valid = src_valid if self.pitch_feature_level == "phoneme_level" else mel_valid
        en_valid = src_valid if self.energy_feature_level == "phoneme_level" else mel_valid
        pitch_loss = masked_mse(pitch_predictions, pitch_targets, pit_valid)
        energy_loss = masked_mse(energy_predictions, energy_targets, en_valid)
        log_duration_targets = jnp.log(duration_targets.astype(f32) + 1.0)
        duration_loss = masked_mse(log_duration_predictions, log_duration_targets, src_valid)

        if D_s is not None and D_t is not None:
            D_s_loss = jnp.mean((D_s.astype(f32) - 1.0) ** 2)
            D_t_loss = jnp.mean((D_t.astype(f32) - 1.0) ** 2)
            alpha = self.alpha
        else:
            # Matches the PyTorch reference: alpha stays 1 and the adversarial
            # terms are 0 when discriminator outputs are absent.
            D_s_loss = jnp.zeros((), f32)
            D_t_loss = jnp.zeros((), f32)
            alpha = 1.0

        recon_loss = alpha * (mel_loss + duration_loss + pitch_loss + energy_loss)
        total_loss = recon_loss + D_s_loss + D_t_loss
        return (total_loss, mel_loss, pitch_loss, energy_loss,
                duration_loss, D_s_loss, D_t_loss)


def _reference(inputs, predictions, alpha):
    """Pure-JAX reference mirroring the PyTorch forward (phoneme_level config)."""
    (mel_t, _, _, pit_t, en_t, dur_t, _, _, _, _, _) = inputs[6:]
    (D_s, D_t, mel_p, pit_p, en_p, ldur_p, _, src_m, mel_m, _, _) = predictions
    f32 = jnp.float32
    mel_p = mel_p.astype(f32)
    mel_t = mel_t[:, : mel_m.shape[1], :].astype(f32)
    src_v = jnp.logical_not(src_m).astype(f32)
    mel_v = jnp.logical_not(mel_m).astype(f32)
    ldur_t = jnp.log(dur_t.astype(f32) + 1.0)

    def masked_mean(x, m):
        return jnp.sum(x * m) / jnp.sum(m)

    mel_loss = jnp.sum(jnp.abs(mel_p - mel_t) * mel_v[:, :, None]) / (
        jnp.sum(mel_v) * mel_p.shape[-1])
    pitch_loss = masked_mean((pit_p - pit_t) ** 2, src_v)
    energy_loss = masked_mean((en_p - en_t) ** 2, src_v)
    dur_loss = masked_mean((ldur_p - ldur_t) ** 2, src_v)
    ds_loss = jnp.mean((D_s - 1.0) ** 2)
    dt_loss = jnp.mean((D_t - 1.0) ** 2)
    total = alpha * (mel_loss + dur_loss + pitch_loss + energy_loss) + ds_loss + dt_loss
    return (total, mel_loss, pitch_loss, energy_loss, dur_loss, ds_loss, dt_loss)


def _make_case(key, B, Ls, Lm, M, src_lens, mel_lens, mel_dtype):
    ks = jax.random.split(key, 10)
    mel_tgt = jax.random.normal(ks[0], (B, Lm, M), jnp.float32).astype(mel_dtype)
    mel_pred = jax.random.normal(ks[1], (B, Lm, M), jnp.float32).astype(mel_dtype)
    pitch_tgt = jax.random.normal(ks[2], (B, Ls), jnp.float32)
    pitch_pred = jax.random.normal(ks[3], (B, Ls), jnp.float32)
    energy_tgt = jax.random.normal(ks[4], (B, Ls), jnp.float32)
    energy_pred = jax.random.normal(ks[5], (B, Ls), jnp.float32)
    duration_tgt = jax.random.randint(ks[6], (B, Ls), 0, 5).astype(jnp.float32)
    log_dur_pred = jax.random.normal(ks[7], (B, Ls), jnp.float32)
    D_s = jax.random.normal(ks[8], (B, 1), jnp.float32)
    D_t = jax.random.normal(ks[9], (B, 1), jnp.float32)
    src_masks = jnp.arange(Ls)[None, :] >= jnp.array(src_lens)[:, None]
    mel_masks = jnp.arange(Lm)[None, :] >= jnp.array(mel_lens)[:, None]
    inputs = (None,) * 6 + (mel_tgt, None, None, pitch_tgt, energy_tgt,
                            duration_tgt, None, None, None, None, None)
    predictions = (D_s, D_t, mel_pred, pitch_pred, energy_pred, log_dur_pred,
                   None, src_masks, mel_masks, None, None)
    return inputs, predictions


if __name__ == "__main__":
    preprocess_config = {"preprocessing": {"pitch": {"feature": "phoneme_level"},
                                           "energy": {"feature": "phoneme_level"}}}
    train_config = {"optimizer": {"alpha": 10.0}}
    alpha = train_config["optimizer"]["alpha"]

    key = jax.random.PRNGKey(0)
    k1, k2 = jax.random.split(key)

    # Case 1: tiny shapes -> single full-Lm block.
    case1 = _make_case(k1, B=2, Ls=8, Lm=16, M=32,
                       src_lens=[6, 8], mel_lens=[12, 16], mel_dtype=jnp.float32)
    loss1 = MetaStyleSpeechLossMain(preprocess_config, {}, train_config)

    # Case 2: bf16 mel, ragged lengths and Lm not a tile multiple -> exercises the
    # in-kernel ragged-tail masking and multi-tile accumulation (no host padding).
    case2 = _make_case(k2, B=2, Ls=40, Lm=333, M=80,
                       src_lens=[25, 40], mel_lens=[250, 333], mel_dtype=jnp.bfloat16)
    loss2 = MetaStyleSpeechLossMain(preprocess_config, {}, train_config, tile_lm=128)

    for loss_fn, (inputs, predictions) in ((loss1, case1), (loss2, case2)):
        out = jax.block_until_ready(loss_fn(inputs, predictions))
        ref = _reference(inputs, predictions, alpha)
        for got, exp in zip(out, ref):
            assert jnp.allclose(got, exp, rtol=1e-4, atol=1e-4), (got, exp)

    print("KERNEL_OK")
</pallas_src>

<mosaic_0001>
module attributes {stable_mosaic.version = 11 : i64} {
  func.func @_masked_l1_kernel(%arg0: i32, %arg1: i32, %arg2: memref<2x16x32xf32, #tpu.memory_space<vmem>>, %arg3: memref<2x16x32xf32, #tpu.memory_space<vmem>>, %arg4: memref<2x1xi32, #tpu.memory_space<vmem>>, %arg5: memref<1x8x128xf32, #tpu.memory_space<vmem>>, %arg6: memref<2x16xf32, #tpu.memory_space<vmem>>) attributes {dimension_semantics = [#tpu.dimension_semantics<parallel>, #tpu.dimension_semantics<arbitrary>], iteration_bounds = array<i64: 1, 1>, scalar_prefetch = 0 : i64, scratch_operands = 1 : i64, tpu.core_type = #tpu.core_type<tc>, window_params = [{transform_indices = @transform_0, window_bounds = array<i64: 2, 16, 32>}, {transform_indices = @transform_1, window_bounds = array<i64: 2, 16, 32>}, {pipeline_mode = #tpu.pipeline_mode<synchronous>, transform_indices = @transform_2, window_bounds = array<i64: 2, 1>}, {transform_indices = @transform_3, window_bounds = array<i64: 1, 8, 128>}]} {
    %c0_i32 = arith.constant 0 : i32
    %0 = arith.cmpi eq, %arg1, %c0_i32 : i32
    %1 = arith.extui %0 : i1 to i32
    %c0_i32_0 = arith.constant 0 : i32
    %2 = arith.cmpi ne, %1, %c0_i32_0 : i32
    scf.if %2 {
      %cst_15 = arith.constant 0.000000e+00 : f32
      %25 = vector.broadcast %cst_15 : f32 to vector<2x16xf32>
      %c0_16 = arith.constant 0 : index
      %c0_17 = arith.constant 0 : index
      %26 = vector.load %arg6[%c0_16, %c0_17] : memref<2x16xf32, #tpu.memory_space<vmem>>, vector<2x16xf32>
      tpu.vector_store %arg6[%c0_16, %c0_17], %25 {strides = array<i32>} : memref<2x16xf32, #tpu.memory_space<vmem>>, vector<2x16xf32>,
    } else {
    }
    %c0 = arith.constant 0 : index
    %c0_1 = arith.constant 0 : index
    %c0_2 = arith.constant 0 : index
    %3 = vector.load %arg2[%c0, %c0_1, %c0_2] : memref<2x16x32xf32, #tpu.memory_space<vmem>>, vector<2x16x32xf32>
    %c0_3 = arith.constant 0 : index
    %c0_4 = arith.constant 0 : index
    %c0_5 = arith.constant 0 : index
    %4 = vector.load %arg3[%c0_3, %c0_4, %c0_5] : memref<2x16x32xf32, #tpu.memory_space<vmem>>, vector<2x16x32xf32>
    %5 = arith.subf %3, %4 : vector<2x16x32xf32>
    %6 = math.absf %5 : vector<2x16x32xf32>
    %cst = arith.constant dense<0.000000e+00> : vector<2x16xf32>
    %7 = vector.multi_reduction <add>, %6, %cst [2] : vector<2x16x32xf32> to vector<2x16xf32>
    %c1_i32 = arith.constant 1 : i32
    %8 = arith.muli %arg0, %c1_i32 : i32
    %9 = arith.addi %8, %arg1 : i32
    %c16_i32 = arith.constant 16 : i32
    %10 = arith.muli %9, %c16_i32 : i32
    %11 = tpu.iota {dimensions = array<i32: 1>} : vector<2x16xi32>
    %12 = vector.broadcast %10 : i32 to vector<2x16xi32>
    %13 = arith.addi %12, %11 : vector<2x16xi32>
    %c0_6 = arith.constant 0 : index
    %c0_7 = arith.constant 0 : index
    %14 = vector.load %arg4[%c0_6, %c0_7] : memref<2x1xi32, #tpu.memory_space<vmem>>, vector<2x1xi32>
    %15 = vector.broadcast %14 : vector<2x1xi32> to vector<2x16xi32>
    %16 = arith.cmpi slt, %13, %15 : vector<2x16xi32>
    %c0_8 = arith.constant 0 : index
    %c0_9 = arith.constant 0 : index
    %17 = vector.load %arg6[%c0_8, %c0_9] : memref<2x16xf32, #tpu.memory_space<vmem>>, vector<2x16xf32>
    %cst_10 = arith.constant 0.000000e+00 : f32
    %18 = vector.broadcast %cst_10 : f32 to vector<2x16xf32>
    %19 = arith.select %16, %7, %18 : vector<2x16xi1>, vector<2x16xf32>
    %20 = arith.addf %17, %19 : vector<2x16xf32>
    %c0_11 = arith.constant 0 : index
    %c0_12 = arith.constant 0 : index
    %21 = vector.load %arg6[%c0_11, %c0_12] : memref<2x16xf32, #tpu.memory_space<vmem>>, vector<2x16xf32>
    tpu.vector_store %arg6[%c0_11, %c0_12], %20 {strides = array<i32>} : memref<2x16xf32, #tpu.memory_space<vmem>>, vector<2x16xf32>,
    %c0_i32_13 = arith.constant 0 : i32
    %22 = arith.cmpi eq, %arg1, %c0_i32_13 : i32
    %23 = arith.extui %22 : i1 to i32
    %c0_i32_14 = arith.constant 0 : i32
    %24 = arith.cmpi ne, %23, %c0_i32_14 : i32
    scf.if %24 {
      %cst_15 = arith.constant 0.000000e+00 : f32
      %25 = vector.broadcast %cst_15 : f32 to vector<1x8x128xf32>
      %c0_16 = arith.constant 0 : index
      %c0_17 = arith.constant 0 : index
      %26 = vector.load %arg6[%c0_16, %c0_17] : memref<2x16xf32, #tpu.memory_space<vmem>>, vector<2x16xf32>
      %27 = vector.shape_cast %26 : vector<2x16xf32> to vector<1x2x16xf32>
      %cst_18 = arith.constant dense<0.000000e+00> : vector<1xf32>
      %28 = vector.multi_reduction <add>, %27, %cst_18 [1, 2] : vector<1x2x16xf32> to vector<1xf32>
      %29 = vector.shape_cast %28 : vector<1xf32> to vector<1x1x1xf32>
      %30 = vector.extract %29[0, 0, 0] : f32 from vector<1x1x1xf32>
      %31 = vector.broadcast %30 : f32 to vector<1x8x128xf32>
      %32 = arith.addf %25, %31 : vector<1x8x128xf32>
      %c0_19 = arith.constant 0 : index
      %c0_20 = arith.constant 0 : index
      %c0_21 = arith.constant 0 : index
      %33 = vector.load %arg5[%c0_19, %c0_20, %c0_21] : memref<1x8x128xf32, #tpu.memory_space<vmem>>, vector<1x8x128xf32>
      tpu.vector_store %arg5[%c0_19, %c0_20, %c0_21], %32 {strides = array<i32>} : memref<1x8x128xf32, #tpu.memory_space<vmem>>, vector<1x8x128xf32>,
    } else {
    }
    return
  }
  func.func @transform_0(%arg0: i32, %arg1: i32) -> (i32, i32, i32) {
    %c1_i32 = arith.constant 1 : i32
    %0 = arith.muli %arg0, %c1_i32 : i32
    %1 = arith.addi %0, %arg1 : i32
    %c0_i32 = arith.constant 0 : i32
    %2 = arith.minsi %1, %c0_i32 : i32
    %c0_i32_0 = arith.constant 0 : i32
    %c0_i32_1 = arith.constant 0 : i32
    %c0_i32_2 = arith.constant 0 : i32
    return %c0_i32_0, %2, %c0_i32_1 : i32, i32, i32
  }
  func.func @transform_1(%arg0: i32, %arg1: i32) -> (i32, i32, i32) {
    %c1_i32 = arith.constant 1 : i32
    %0 = arith.muli %arg0, %c1_i32 : i32
    %1 = arith.addi %0, %arg1 : i32
    %c0_i32 = arith.constant 0 : i32
    %2 = arith.minsi %1, %c0_i32 : i32
    %c0_i32_0 = arith.constant 0 : i32
    %c0_i32_1 = arith.constant 0 : i32
    %c0_i32_2 = arith.constant 0 : i32
    return %c0_i32_0, %2, %c0_i32_1 : i32, i32, i32
  }
  func.func @transform_2(%arg0: i32, %arg1: i32) -> (i32, i32) {
    %c0_i32 = arith.constant 0 : i32
    %c0_i32_0 = arith.constant 0 : i32
    %c0_i32_1 = arith.constant 0 : i32
    return %c0_i32, %c0_i32_0 : i32, i32
  }
  func.func @transform_3(%arg0: i32, %arg1: i32) -> (i32, i32, i32) {
    %c0_i32 = arith.constant 0 : i32
    %c0_i32_0 = arith.constant 0 : i32
    %c0_i32_1 = arith.constant 0 : i32
    return %arg0, %c0_i32, %c0_i32_0 : i32, i32, i32
  }
}

</mosaic_0001>

<llo_original>
// kernel: tpu_custom_call.1
$region0: #{tpu_custom_call.1}
  #allocation0 [shape = 'u32[]', space=smem, size = 0x4, offset = 0x4, fixed_abs, tag = 'smem constant byte address 0x4 - core index']
  #allocation1 [shape = 'u32[144,128]{1,0:T(1,128)}', space=vmem, size = 0x12000, scoped, tag = 'internal scratch']
  #allocation2 [shape = 'f32[2,16]{1,0:T(2,128)}', space=vmem, size = 0x400, scoped, tag = 'scratch operand']
  %s0 = inlined_call_operand.hbm [shape: f32[2,16,32], index: 0, kind: input, shape index: {}]
  %s1 = inlined_call_operand.hbm [shape: f32[2,16,32], index: 1, kind: input, shape index: {}]
  %s2 = inlined_call_operand.vmem [shape: s32[2,1], index: 2, kind: input, shape index: {}]
  %s3 = inlined_call_operand.hbm [shape: f32[1,8,128], index: 3, kind: output, shape index: {}]
  %s4 = sld [smem:[#allocation0]]
  $region38: #{tpu_custom_call.1} parent=0
    _
  %s6 = ssub.s32 1, %s4
  %s7 = scalar_select 0, %s6, %s4
  $region1: #{tpu_custom_call.1} parent=0
    #allocation3 [shape = 'u8[16384]{0}', space=vmem, size = 0x4000, scoped, tag = 'input window, operand 0, single buffered']
    #allocation4 [shape = 's32[1]{0}', space=sflag, size = 0x4, scoped, tag = 'scoped memory for tpu_custom_call.1']
    #allocation5 [shape = 's32[1]{0}', space=sflag, size = 0x4, scoped, tag = 'scoped memory for tpu_custom_call.1']
    #allocation6 [shape = 'u8[16384]{0}', space=vmem, size = 0x4000, scoped, tag = 'input window, operand 1, single buffered']
    #allocation7 [shape = 's32[1]{0}', space=sflag, size = 0x4, scoped, tag = 'scoped memory for tpu_custom_call.1']
    #allocation8 [shape = 'u8[4096]{0}', space=vmem, size = 0x1000, scoped, tag = 'output window, operand 0, single buffered']
    %8 = vsyncpa [#allocation4], 0
    %9 = vsyncpa [#allocation7], 0
    %10 = vsyncpa [#allocation5], 0
    // Predicated region
    $region2: #{tpu_custom_call.1} parent=1 // pred_check
      _
    $region3: #{tpu_custom_call.1} parent=1 // pred_check_branch
      %12 = sbr.rel (0) target = $region5
    $region4: #{tpu_custom_call.1} parent=1 // pred_region
      %s13 = sadd.s32 0, 0
      %p14 = scmp.lt.s32.totalorder %s13, 0
      %s15 = scalar_select %p14, %s13, 0
      %s16 = smul.u32 2, %s15
      %s18 = ssub.s32 512, 512
      %19 = vsyncadd [#allocation4], %s18
      %s20 = smul.addr %s16, 128
      %s21 = scalar_lea.hbm %s0, %s20
      %s22 = sshll.u32 [#allocation3], 4
      %s23 = int_to_ptr.vmem [resolvable:$true] %s22
      %28 = dma.hbm_to_vmem [thread:$0]  %s21, 512, %s23, [#allocation4], 128, 128, 8
    $region5: #{tpu_custom_call.1} parent=1 // pred_fallthru
      _
    // Predicated region
    $region6: #{tpu_custom_call.1} parent=1 // pred_check
      _
    $region7: #{tpu_custom_call.1} parent=1 // pred_check_branch
      %30 = sbr.rel (0) target = $region9
    $region8: #{tpu_custom_call.1} parent=1 // pred_region
      %s31 = sadd.s32 0, 0
      %p32 = scmp.lt.s32.totalorder %s31, 0
      %s33 = scalar_select %p32, %s31, 0
      %s34 = smul.u32 2, %s33
      %s36 = ssub.s32 512, 512
      %37 = vsyncadd [#allocation7], %s36
      %s38 = smul.addr %s34, 128
      %s39 = scalar_lea.hbm %s1, %s38
      %s40 = sshll.u32 [#allocation6], 4
      %s41 = int_to_ptr.vmem [resolvable:$true] %s40
      %46 = dma.hbm_to_vmem [thread:$0]  %s39, 512, %s41, [#allocation7], 128, 128, 8
    $region9: #{tpu_custom_call.1} parent=1 // pred_fallthru
      _
    // Predicated region
    $region10: #{tpu_custom_call.1} parent=1 // pred_check
      _
    $region11: #{tpu_custom_call.1} parent=1 // pred_check_branch
      %48 = sbr.rel (0) target = $region13
    $region12: #{tpu_custom_call.1} parent=1 // pred_region
      _
    $region13: #{tpu_custom_call.1} parent=1 // pred_fallthru
      _
    // Predicated region
    $region14: #{tpu_custom_call.1} parent=1 // pred_check
      _
    $region15: #{tpu_custom_call.1} parent=1 // pred_check_branch
      %50 = sbr.rel (0) target = $region17
    $region16: #{tpu_custom_call.1} parent=1 // pred_region
      %51 = dma.done [#allocation4], 512
    $region17: #{tpu_custom_call.1} parent=1 // pred_fallthru
      _
    // Predicated region
    $region18: #{tpu_custom_call.1} parent=1 // pred_check
      _
    $region19: #{tpu_custom_call.1} parent=1 // pred_check_branch
      %53 = sbr.rel (0) target = $region21
    $region20: #{tpu_custom_call.1} parent=1 // pred_region
      %54 = dma.done [#allocation7], 512
    $region21: #{tpu_custom_call.1} parent=1 // pred_fallthru
      _
    %s55 = sadd.s32 0, 0
    %p56 = scmp.lt.s32.totalorder %s55, 0
    %s57 = scalar_select %p56, %s55, 0
    %s58 = smul.u32 2, %s57
    %s59 = sadd.s32 0, 0
    %p60 = scmp.lt.s32.totalorder %s59, 0
    %s61 = scalar_select %p60, %s59, 0
    %s62 = smul.u32 2, %s61
    %p63 = scmp.eq.s32.totalorder 0, 0
    // Predicated region
    $region22: #{tpu_custom_call.1} parent=1 // pred_check
      %p64 = pneg %p63
    $region23: #{tpu_custom_call.1} parent=1 // pred_check_branch
      %66 = sbr.rel (%p64) target = $region25
    $region24: #{tpu_custom_call.1} parent=1 // pred_region
      %vm67 = vcmask 123904
      %68 = vst.msk [vmem:[#allocation2] sm:$0x3] %vm67, 0.0
    $region25: #{tpu_custom_call.1} parent=1 // pred_fallthru
      _
    %v69 = vld [vmem:[#allocation3] sm:$0xff]
    %v70 = vld [vmem:[#allocation3 + $0x8] sm:$0xff]
    %v71 = vld [vmem:[#allocation3 + $0x10] sm:$0xff]
    %v72 = vld [vmem:[#allocation3 + $0x18] sm:$0xff]
    %v73 = vld [vmem:[#allocation6] sm:$0xff]
    %v74 = vld [vmem:[#allocation6 + $0x8] sm:$0xff]
    %v75 = vld [vmem:[#allocation6 + $0x10] sm:$0xff]
    %v76 = vld [vmem:[#allocation6 + $0x18] sm:$0xff]
    %v77 = vsub.f32 %v69, %v73
    %v78 = vsub.f32 %v70, %v74
    %v79 = vsub.f32 %v71, %v75
    %v80 = vsub.f32 %v72, %v76
    %v81 = vand.u32 2147483647, %v77
    %v82 = vand.u32 2147483647, %v78
    %v83 = vand.u32 2147483647, %v79
    %v84 = vand.u32 2147483647, %v80
    %vm85 = vcmask 261120
    %v86 = vsel %vm85, %v81, 0.0
    %87 = vadd.xlane.f32.xlu0 %v86
    %v88 = vpop.xlane.xlu0 %87
    %v89 = vsel %vm85, %v82, 0.0
    %90 = vadd.xlane.f32.xlu0 %v89
    %v91 = vpop.xlane.xlu0 %90
    %v92 = vsel %vm85, %v83, 0.0
    %93 = vadd.xlane.f32.xlu0 %v92
    %v94 = vpop.xlane.xlu0 %93
    %v95 = vsel %vm85, %v84, 0.0
    %96 = vadd.xlane.f32.xlu0 %v95
    %v97 = vpop.xlane.xlu0 %96
    %s98 = sadd.s32 0, 0
    %s99 = smul.u32 %s98, 16
    %v100 = vlaneseq
    %v101 = vand.u32 %v100, 127
    %v102 = vstv %s99
    %v103 = vadd.s32 %v102, %v101
    %v104 = vld [vmem:[%s2] sm:$0x3]
    %105 = vset.pattern.permute.xlu0 0
    %106 = vperm.xlu0 %105, %v104
    %v107 = vpop.permute.xlu0 %106
    %vm108 = vcmp.lt.s32.totalorder %v103, %v107
    %v109 = vld [vmem:[#allocation2] sm:$0x3]
    %v114 = vlaneseq
    %v115 = vshrl.u32 %v114, 7
    %v116 = vsub.s32 %v101, %v115
    %v117 = vrot.slane %v88, %v116
    %v118 = vadd.s32 %v101, 4294967288
    %v119 = vlaneseq
    %v120 = vshrl.u32 %v119, 7
    %v121 = vsub.s32 %v118, %v120
    %v122 = vrot.slane %v91, %v121
    %vm123 = vcmask 130112
    %v124 = vsel %vm123, %v122, %v117
    %v125 = vlaneseq
    %v126 = vshrl.u32 %v125, 7
    %v127 = vsub.s32 %v101, %v126
    %v128 = vrot.slane %v94, %v127
    %v129 = vlaneseq
    %v130 = vshrl.u32 %v129, 7
    %v131 = vsub.s32 %v118, %v130
    %v132 = vrot.slane %v97, %v131
    %v133 = vsel %vm123, %v132, %v128
    %vm134 = vcmask 1041409
    %v135 = vsel %vm134, %v133, %v124
    %v137 = vsel %vm108, %v135, 0.0
    %v138 = vadd.f32 %v109, %v137
    %vm139 = vcmask 123904
    %140 = vst.msk [vmem:[#allocation2] sm:$0x3] %vm139, %v138
    // Predicated region
    $region26: #{tpu_custom_call.1} parent=1 // pred_check
      %p141 = pneg %p63
    $region27: #{tpu_custom_call.1} parent=1 // pred_check_branch
      %143 = sbr.rel (%p141) target = $region29
    $region28: #{tpu_custom_call.1} parent=1 // pred_region
      %v144 = vld [vmem:[#allocation2] sm:$0x3]
      %v145 = vsel %vm139, %v144, 0.0
      %146 = vadd.xlane.f32.xlu0 %v145
      %v147 = vpop.xlane.xlu0 %146
      %v148 = vrot.slane %v147, 4
      %v149 = vadd.f32 %v147, %v148
      %v150 = vrot.slane %v149, 2
      %v151 = vadd.f32 %v149, %v150
      %v152 = vrot.slane %v151, 1
      %v153 = vadd.f32 %v151, %v152
      %s154 = vtos %v153
      %v155 = vstv %s154
      %v156 = vadd.f32 %v155, 0.0
      %157 = vst [vmem:[#allocation8] sm:$0xff] %v156
    $region29: #{tpu_custom_call.1} parent=1 // pred_fallthru
      _
    // Predicated region
    $region30: #{tpu_custom_call.1} parent=1 // pred_check
      _
    $region31: #{tpu_custom_call.1} parent=1 // pred_check_branch
      %159 = sbr.rel (0) target = $region33
    $region32: #{tpu_custom_call.1} parent=1 // pred_region
      %s161 = ssub.s32 128, 128
      %162 = vsyncadd [#allocation5], %s161
      %s164 = sshll.u32 [#allocation8], 4
      %s165 = int_to_ptr.vmem [resolvable:$true] %s164
      %167 = dma.vmem_to_hbm [thread:$0]  %s165, 128, %s3, [#allocation5]
    $region33: #{tpu_custom_call.1} parent=1 // pred_fallthru
      _
    // Predicated region
    $region34: #{tpu_custom_call.1} parent=1 // pred_check
      _
    $region35: #{tpu_custom_call.1} parent=1 // pred_check_branch
      %169 = sbr.rel (0) target = $region37
    $region36: #{tpu_custom_call.1} parent=1 // pred_region
      %170 = dma.done [#allocation5], 128
    $region37: #{tpu_custom_call.1} parent=1 // pred_fallthru
      _
    %171 = vsyncpa [#allocation4], 1
    %172 = vsyncpa [#allocation7], 1
    %173 = vsyncpa [#allocation5], 1

</llo_original>
